<compile_context>
chip_gen: v6e
topology: v6e:2x2x1
jax: 0.10.0
libtpu: 0.0.40
codegen_flags: <defaults>
</compile_context>

<pallas_src>
import functools

import jax
import jax.numpy as jnp
from jax.experimental import pallas as pl
from jax.experimental.pallas import tpu as pltpu


def _round_up(v, m):
    return (v + m - 1) // m * m


def _vmem_plan():
    """(per-input-buffer byte target, vmem_limit_bytes) for this TPU generation."""
    try:
        cap = int(pltpu.get_tpu_info().vmem_capacity_bytes)
    except Exception:
        cap = 64 << 20                       # conservative default (v7x per-core VMEM)
    if cap >= (96 << 20):                    # v5e / v6e: 128 MiB physical VMEM
        return 12 << 20, 72 << 20
    # v7x: 64 MiB physical -> 2x input buffers + f32 intermediates well under limit
    return 6 << 20, 48 << 20


def _choose_tiles(nc, hw, itemsize, per_buf_target):
    sub = {4: 8, 2: 16, 1: 32}.get(itemsize, 8)      # sublane multiple per dtype
    row_bytes = hw * itemsize

    # Split the spatial axis only when even a minimal row tile would blow the
    # per-buffer budget; a split tile_hw must be a multiple of 128.
    if sub * row_bytes > per_buf_target:
        tile_hw = max(128, (per_buf_target // (sub * itemsize)) // 128 * 128)
        tile_hw = min(tile_hw, hw)
    else:
        tile_hw = hw

    # Rows per tile: fill the byte budget; prefer multiples of 128 so the
    # lane-dense output store is a full-lane unmasked vst.
    max_rows = max(sub, per_buf_target // (tile_hw * itemsize))
    tile_rows = min(max_rows, _round_up(nc, sub))
    if tile_rows >= 128:
        tile_rows = (tile_rows // 128) * 128
    else:
        tile_rows = max(sub, (tile_rows // sub) * sub)

    # v7x megacore: avoid collapsing the row axis to one grid step when there
    # is enough work to be worth splitting across the two TensorCores.
    if nc <= tile_rows and nc * hw * itemsize >= (2 << 20):
        if nc >= 2 * 128:
            tile_rows = _round_up((nc + 1) // 2, 128)
        elif nc >= 2 * sub:
            tile_rows = _round_up((nc + 1) // 2, sub)

    return tile_rows, tile_hw


def _static_small_int_exponent(p):
    """Return p as a small int if it is concrete and integral, else None."""
    try:
        pv = float(jax.device_get(jnp.ravel(p))[0])
    except Exception:                        # traced under jit -> general path
        return None
    r = int(round(pv))
    if abs(pv - r) < 1e-12 and 1 <= r <= 8:
        return r
    return None


def gem_kernel(p_ref, x_ref, o_ref, acc_ref, *, eps, inv_hw, hw, tile_hw,
               int_p, bf16_eup):
    # p_ref: SMEM (1,) learnable exponent (scalar prefetch)
    # x_ref: VMEM (tile_rows, tile_hw) input tile
    # o_ref: VMEM (1, 1, tile_rows) lane-dense pooled row
    # acc_ref: VMEM (tile_rows, 1) f32 running row sum
    j = pl.program_id(1)

    @pl.when(j == 0)
    def _init():
        acc_ref[...] = jnp.zeros_like(acc_ref)

    p = p_ref[0]
    x = x_ref[...].astype(jnp.float32)
    xc = jnp.maximum(x, jnp.float32(eps))            # clamp(min=eps), eps > 0

    if int_p is not None:
        # Small-integer exponent (default init p=3): repeated multiply on the
        # 4-wide VALU instead of two EUP transcendentals per element.
        xp = xc
        for _ in range(int_p - 1):
            xp = xp * xc
    elif bf16_eup:
        # Optional bf16 EUP path (v6e/v7x); f32 accumulation is kept below.
        xp = jnp.exp(p.astype(jnp.bfloat16) *
                     jnp.log(xc.astype(jnp.bfloat16))).astype(jnp.float32)
    else:
        xp = jnp.exp(p * jnp.log(xc))                # xc ** p, traced exponent

    if hw % tile_hw != 0:
        # Ragged last spatial tile: zero out-of-range lanes before reducing.
        col = jax.lax.broadcasted_iota(jnp.int32, xp.shape, 1)
        xp = jnp.where(j * tile_hw + col < hw, xp, 0.0)

    acc_ref[...] += jnp.sum(xp, axis=-1, keepdims=True)   # f32 row sums

    @pl.when(j == pl.num_programs(1) - 1)
    def _finalize():
        m = acc_ref[:, 0] * jnp.float32(inv_hw)      # mean = sum * 1/(H*W)
        r = jnp.exp(jnp.log(m) * (1.0 / p))          # m ** (1/p), once per row
        o_ref[...] = r[None, None, :].astype(o_ref.dtype)


def gem_forward(x, p, eps=1e-6, *, use_bf16_transcendentals=False):
    """x: (N, C, H, W); p: (1,) float32. Returns (N, C, 1, 1)."""
    N, C, H, W = x.shape
    nc, hw = N * C, H * W
    x2 = x.reshape(nc, hw)

    itemsize = jnp.dtype(x.dtype).itemsize
    per_buf_target, vmem_limit = _vmem_plan()
    tile_rows, tile_hw = _choose_tiles(nc, hw, itemsize, per_buf_target)
    num_row_tiles = (nc + tile_rows - 1) // tile_rows
    num_hw_tiles = (hw + tile_hw - 1) // tile_hw

    int_p = _static_small_int_exponent(p)

    cost = pl.CostEstimate(
        flops=4 * nc * hw,
        transcendentals=(0 if int_p is not None else 2 * nc * hw) + 2 * nc,
        bytes_accessed=itemsize * nc * hw + itemsize * nc + 4,
    )

    kernel = functools.partial(
        gem_kernel, eps=float(eps), inv_hw=1.0 / hw, hw=hw, tile_hw=tile_hw,
        int_p=int_p, bf16_eup=bool(use_bf16_transcendentals))

    out = pl.pallas_call(
        kernel,
        out_shape=jax.ShapeDtypeStruct((num_row_tiles, 1, tile_rows), x.dtype),
        grid_spec=pltpu.PrefetchScalarGridSpec(
            num_scalar_prefetch=1,                     # p -> SMEM
            grid=(num_row_tiles, num_hw_tiles),
            in_specs=[
                pl.BlockSpec((tile_rows, tile_hw), lambda i, j, p_ref: (i, j)),
            ],
            out_specs=pl.BlockSpec((1, 1, tile_rows),
                                   lambda i, j, p_ref: (i, 0, 0)),
            scratch_shapes=[pltpu.VMEM((tile_rows, 1), jnp.float32)],
        ),
        compiler_params=pltpu.CompilerParams(
            dimension_semantics=("parallel", "arbitrary"),
            vmem_limit_bytes=vmem_limit,
        ),
        cost_estimate=cost,
    )(p.astype(jnp.float32), x2)

    # (num_row_tiles, 1, tile_rows) -> first nc pooled values -> (N, C, 1, 1).
    return out.reshape(num_row_tiles * tile_rows)[:nc].reshape(N, C, 1, 1)


def gem_reference(x, p, eps=1e-6):
    xc = jnp.maximum(x, jnp.float32(eps))            # clamp(min=eps)
    xp = xc ** p[0]
    m = jnp.mean(xp, axis=(-2, -1), keepdims=True)
    return m ** (1.0 / p[0])


if __name__ == "__main__":
    key = jax.random.PRNGKey(0)
    N, C, H, W = 2, 4, 16, 16
    x = jax.random.normal(key, (N, C, H, W), dtype=jnp.float32)

    # Parameter init identical to nn.Parameter(torch.ones(1) * 3)
    p = jnp.ones((1,), dtype=jnp.float32) * 3.0
    eps = 1e-6

    y = gem_forward(x, p, eps)
    jax.block_until_ready(y)

    y_ref = gem_reference(x, p, eps)
    assert y.shape == (N, C, 1, 1)
    assert jnp.allclose(y, y_ref, rtol=1e-4, atol=1e-6), "mismatch vs reference"

    print("KERNEL_OK")
</pallas_src>

<mosaic_0001>
module attributes {stable_mosaic.version = 11 : i64} {
  func.func @gem_kernel(%arg0: i32, %arg1: i32, %arg2: memref<1xf32, #tpu.memory_space<smem>>, %arg3: memref<8x256xf32, #tpu.memory_space<vmem>>, %arg4: memref<1x1x8xf32, #tpu.memory_space<vmem>>, %arg5: memref<8x1xf32, #tpu.memory_space<vmem>>) attributes {dimension_semantics = [#tpu.dimension_semantics<parallel>, #tpu.dimension_semantics<arbitrary>], iteration_bounds = array<i64: 1, 1>, scalar_prefetch = 1 : i64, scratch_operands = 1 : i64, tpu.core_type = #tpu.core_type<tc>, window_params = [{transform_indices = @transform_0, window_bounds = array<i64: 8, 256>}, {transform_indices = @transform_1, window_bounds = array<i64: 1, 1, 8>}]} {
    %c0_i32 = arith.constant 0 : i32
    %0 = arith.cmpi eq, %arg1, %c0_i32 : i32
    %1 = arith.extui %0 : i1 to i32
    %c0_i32_0 = arith.constant 0 : i32
    %2 = arith.cmpi ne, %1, %c0_i32_0 : i32
    scf.if %2 {
      %cst_10 = arith.constant 0.000000e+00 : f32
      %17 = vector.broadcast %cst_10 : f32 to vector<8x1xf32>
      %c0_11 = arith.constant 0 : index
      %c0_12 = arith.constant 0 : index
      %18 = vector.load %arg5[%c0_11, %c0_12] : memref<8x1xf32, #tpu.memory_space<vmem>>, vector<8x1xf32>
      tpu.vector_store %arg5[%c0_11, %c0_12], %17 {strides = array<i32>} : memref<8x1xf32, #tpu.memory_space<vmem>>, vector<8x1xf32>,
    } else {
    }
    %c0 = arith.constant 0 : index
    %3 = memref.load %arg2[%c0] : memref<1xf32, #tpu.memory_space<smem>>
    %c0_1 = arith.constant 0 : index
    %c0_2 = arith.constant 0 : index
    %4 = vector.load %arg3[%c0_1, %c0_2] : memref<8x256xf32, #tpu.memory_space<vmem>>, vector<8x256xf32>
    %cst = arith.constant 9.99999997E-7 : f32
    %5 = vector.broadcast %cst : f32 to vector<8x256xf32>
    %6 = arith.maximumf %4, %5 : vector<8x256xf32>
    %7 = arith.mulf %6, %6 : vector<8x256xf32>
    %8 = arith.mulf %7, %6 : vector<8x256xf32>
    %c0_3 = arith.constant 0 : index
    %c0_4 = arith.constant 0 : index
    %9 = vector.load %arg5[%c0_3, %c0_4] : memref<8x1xf32, #tpu.memory_space<vmem>>, vector<8x1xf32>
    %cst_5 = arith.constant dense<0.000000e+00> : vector<8xf32>
    %10 = vector.multi_reduction <add>, %8, %cst_5 [1] : vector<8x256xf32> to vector<8xf32>
    %11 = vector.shape_cast %10 : vector<8xf32> to vector<8x1xf32>
    %12 = arith.addf %9, %11 : vector<8x1xf32>
    %c0_6 = arith.constant 0 : index
    %c0_7 = arith.constant 0 : index
    %13 = vector.load %arg5[%c0_6, %c0_7] : memref<8x1xf32, #tpu.memory_space<vmem>>, vector<8x1xf32>
    tpu.vector_store %arg5[%c0_6, %c0_7], %12 {strides = array<i32>} : memref<8x1xf32, #tpu.memory_space<vmem>>, vector<8x1xf32>,
    %c0_i32_8 = arith.constant 0 : i32
    %14 = arith.cmpi eq, %arg1, %c0_i32_8 : i32
    %15 = arith.extui %14 : i1 to i32
    %c0_i32_9 = arith.constant 0 : i32
    %16 = arith.cmpi ne, %15, %c0_i32_9 : i32
    scf.if %16 {
      %c0_10 = arith.constant 0 : index
      %c0_11 = arith.constant 0 : index
      %17 = vector.load %arg5[%c0_10, %c0_11] : memref<8x1xf32, #tpu.memory_space<vmem>>, vector<8x1xf32>
      %18 = vector.shape_cast %17 : vector<8x1xf32> to vector<8xf32>
      %cst_12 = arith.constant 3.906250e-03 : f32
      %19 = vector.broadcast %cst_12 : f32 to vector<8xf32>
      %20 = arith.mulf %18, %19 : vector<8xf32>
      %21 = math.log %20 : vector<8xf32>
      %cst_13 = arith.constant 1.000000e+00 : f32
      %22 = arith.divf %cst_13, %3 : f32
      %23 = vector.broadcast %22 : f32 to vector<8xf32>
      %24 = arith.mulf %21, %23 : vector<8xf32>
      %25 = math.exp %24 : vector<8xf32>
      %26 = vector.shape_cast %25 : vector<8xf32> to vector<1x1x8xf32>
      %c0_14 = arith.constant 0 : index
      %c0_15 = arith.constant 0 : index
      %c0_16 = arith.constant 0 : index
      %27 = vector.load %arg4[%c0_14, %c0_15, %c0_16] : memref<1x1x8xf32, #tpu.memory_space<vmem>>, vector<1x1x8xf32>
      tpu.vector_store %arg4[%c0_14, %c0_15, %c0_16], %26 {strides = array<i32>} : memref<1x1x8xf32, #tpu.memory_space<vmem>>, vector<1x1x8xf32>,
    } else {
    }
    return
  }
  func.func @transform_0(%arg0: i32, %arg1: i32, %arg2: memref<1xf32, #tpu.memory_space<smem>>) -> (i32, i32) {
    %c0_i32 = arith.constant 0 : i32
    return %arg0, %arg1 : i32, i32
  }
  func.func @transform_1(%arg0: i32, %arg1: i32, %arg2: memref<1xf32, #tpu.memory_space<smem>>) -> (i32, i32, i32) {
    %c0_i32 = arith.constant 0 : i32
    %c0_i32_0 = arith.constant 0 : i32
    %c0_i32_1 = arith.constant 0 : i32
    return %arg0, %c0_i32, %c0_i32_0 : i32, i32, i32
  }
}

</mosaic_0001>

<llo_original>
// kernel: tpu_custom_call.1
$region0: #{tpu_custom_call.1}
  #allocation0 [shape = 'u32[]', space=smem, size = 0x4, offset = 0x4, fixed_abs, tag = 'smem constant byte address 0x4 - core index']
  #allocation1 [shape = 'u32[144,128]{1,0:T(1,128)}', space=vmem, size = 0x12000, scoped, tag = 'internal scratch']
  #allocation2 [shape = 'f32[8,1]{1,0:T(8,128)}', space=vmem, size = 0x1000, scoped, tag = 'scratch operand']
  #allocation3 [shape = 's32[1]{0}', space=sflag, size = 0x4, scoped, tag = 'scoped memory for tpu_custom_call.1']
  #allocation4 [shape = 'f32[1]{0:T(128)S(6)}', space=smem, size = 0x200, scoped, tag = 'prefetched SMEM operand 0']
  %s0 = inlined_call_operand.<no memory space> [shape: f32[1], index: 0, kind: input, shape index: {}]
  %s1 = inlined_call_operand.hbm [shape: f32[8,256], index: 1, kind: input, shape index: {}]
  %s2 = inlined_call_operand.hbm [shape: f32[1,1,8], index: 2, kind: output, shape index: {}]
  %s3 = sld [smem:[#allocation0]]
  $region26: #{tpu_custom_call.1} parent=0
    _
  %s5 = ssub.s32 1, %s3
  %s6 = scalar_select 0, %s5, %s3
  %7 = sst [smem:[#allocation4]] %s0
  $region1: #{tpu_custom_call.1} parent=0
    #allocation5 [shape = 'u8[8192]{0}', space=vmem, size = 0x2000, scoped, tag = 'input window, operand 1, single buffered']
    #allocation6 [shape = 's32[1]{0}', space=sflag, size = 0x4, scoped, tag = 'scoped memory for tpu_custom_call.1']
    #allocation7 [shape = 's32[1]{0}', space=sflag, size = 0x4, scoped, tag = 'scoped memory for tpu_custom_call.1']
    #allocation8 [shape = 'u8[512]{0}', space=vmem, size = 0x400, scoped, tag = 'output window, operand 0, single buffered']
    %8 = vsyncpa [#allocation6], 0
    %9 = vsyncpa [#allocation7], 0
    // Predicated region
    $region2: #{tpu_custom_call.1} parent=1 // pred_check
      _
    $region3: #{tpu_custom_call.1} parent=1 // pred_check_branch
      %11 = sbr.rel (0) target = $region5
    $region4: #{tpu_custom_call.1} parent=1 // pred_region
      %s13 = ssub.s32 256, 256
      %14 = vsyncadd [#allocation6], %s13
      %s16 = sshll.u32 [#allocation5], 4
      %s17 = int_to_ptr.vmem [resolvable:$true] %s16
      %19 = dma.hbm_to_vmem [thread:$0]  %s1, 256, %s17, [#allocation6]
    $region5: #{tpu_custom_call.1} parent=1 // pred_fallthru
      _
    // Predicated region
    $region6: #{tpu_custom_call.1} parent=1 // pred_check
      _
    $region7: #{tpu_custom_call.1} parent=1 // pred_check_branch
      %21 = sbr.rel (0) target = $region9
    $region8: #{tpu_custom_call.1} parent=1 // pred_region
      %22 = dma.done [#allocation6], 256
    $region9: #{tpu_custom_call.1} parent=1 // pred_fallthru
      _
    %p23 = scmp.eq.s32.totalorder 0, 0
    // Predicated region
    $region10: #{tpu_custom_call.1} parent=1 // pred_check
      %p24 = pneg %p23
    $region11: #{tpu_custom_call.1} parent=1 // pred_check_branch
      %26 = sbr.rel (%p24) target = $region13
    $region12: #{tpu_custom_call.1} parent=1 // pred_region
      %vm27 = vcmask 7168
      %28 = vst.msk [vmem:[#allocation2] sm:$0xff] %vm27, 0.0
    $region13: #{tpu_custom_call.1} parent=1 // pred_fallthru
      _
    %s29 = sld [smem:[#allocation4]]
    %v30 = vld [vmem:[#allocation5] sm:$0xff]
    %v31 = vld [vmem:[#allocation5 + $0x8] sm:$0xff]
    %v32 = vmax.f32 %v30, 1e-06
    %v33 = vmax.f32 %v31, 1e-06
    %v34 = vmul.f32 %v32, %v32
    %v35 = vmul.f32 %v33, %v33
    %v36 = vmul.f32 %v34, %v32
    %v37 = vmul.f32 %v35, %v33
    %v38 = vld [vmem:[#allocation2] sm:$0xff]
    %v39 = vadd.f32 %v36, %v37
    %40 = vadd.xlane.f32.xlu0 %v39
    %v41 = vpop.xlane.xlu0 %40
    %v42 = vadd.f32 %v38, %v41
    %vm43 = vcmask 7168
    %44 = vst.msk [vmem:[#allocation2] sm:$0xff] %vm43, %v42
    // Predicated region
    $region14: #{tpu_custom_call.1} parent=1 // pred_check
      %p45 = pneg %p23
    $region15: #{tpu_custom_call.1} parent=1 // pred_check_branch
      %47 = sbr.rel (%p45) target = $region17
    $region16: #{tpu_custom_call.1} parent=1 // pred_region
      %v48 = vld [vmem:[#allocation2] sm:$0xff]
      %v49 = vmul.f32 %v48, 0.00390625
      %v50 = vlog2.pop %v49
      %v51 = vmul.f32 %v50, 0.6931472
      %v52 = vstv %s29
      %v53 = vrcp.pop %v52
      %s54 = vtos %v53
      %v55 = vstv %s54
      %v56 = vmul.f32 %v51, %v55
      %v57 = vmul.f32 %v56, 1.442695
      %v58 = vpow.pop %v57
      %60 = vset.pattern.permute.xlu0 0
      %61 = vperm.xlu0 %60, %v58
      %v62 = vpop.permute.xlu0 %61
      %v63 = vlaneseq
      %v64 = vand.u32 %v63, 127
      %v65 = vlaneseq
      %v66 = vshrl.u32 %v65, 7
      %v67 = vsub.s32 %v64, %v66
      %v68 = vrot.slane %v62, %v67
      %vm70 = vcmask 57344
      %71 = vst.msk [vmem:[#allocation8] sm:$0x1] %vm70, %v68
    $region17: #{tpu_custom_call.1} parent=1 // pred_fallthru
      _
    // Predicated region
    $region18: #{tpu_custom_call.1} parent=1 // pred_check
      _
    $region19: #{tpu_custom_call.1} parent=1 // pred_check_branch
      %73 = sbr.rel (0) target = $region21
    $region20: #{tpu_custom_call.1} parent=1 // pred_region
      %s75 = ssub.s32 16, 16
      %76 = vsyncadd [#allocation7], %s75
      %s78 = sshll.u32 [#allocation8], 4
      %s79 = int_to_ptr.vmem [resolvable:$true] %s78
      %81 = dma.vmem_to_hbm [thread:$0]  %s79, 16, %s2, [#allocation7]
    $region21: #{tpu_custom_call.1} parent=1 // pred_fallthru
      _
    // Predicated region
    $region22: #{tpu_custom_call.1} parent=1 // pred_check
      _
    $region23: #{tpu_custom_call.1} parent=1 // pred_check_branch
      %83 = sbr.rel (0) target = $region25
    $region24: #{tpu_custom_call.1} parent=1 // pred_region
      %84 = dma.done [#allocation7], 16
    $region25: #{tpu_custom_call.1} parent=1 // pred_fallthru
      _
    %85 = vsyncpa [#allocation6], 1
    %86 = vsyncpa [#allocation7], 1

</llo_original>
